<compile_context>
chip_gen: v7x
topology: tpu7x:2x2x1
jax: 0.10.0
libtpu: 0.0.40
codegen_flags: <defaults>
</compile_context>

<pallas_src>
import functools

import jax
import jax.numpy as jnp
from jax.experimental import pallas as pl
from jax.experimental.pallas import tpu as pltpu


def _round_up(x, m):
    return (x + m - 1) // m * m


def _device_kind():
    try:
        return jax.devices()[0].device_kind.lower()
    except Exception:
        return ""


def _pick_q_tile(n, device_kind):
    if n <= 128:
        # bf16 inputs/outputs pack 16 rows per sublane tile; round up to 16.
        return _round_up(n, 16)
    if "v5" in device_kind:
        return 128      # v5e: 4x128^2 MXU, keep the smaller row stream.
    return 256          # v6e / v7x: 256-deep MXU, fewer grid steps.


def _vmem_limit_bytes(working_set_bytes, device_kind):
    # v7x has only 64 MiB VMEM per TensorCore -> cap the scoped limit lower there
    # and leave headroom for compiler-internal scratch / neighboring fusions.
    cap = (40 if "v7" in device_kind else 64) * 1024 * 1024
    need = int(working_set_bytes) + 16 * 1024 * 1024   # compiler-temporary margin
    return max(32 * 1024 * 1024, min(need, cap))


def _qkv_kernel(x_ref, w_ref, q_ref, k_ref, v_ref, *, dim):
    # x_ref: (TQ, C) bf16 ; w_ref: (C, 3C) bf16 (softmax scale folded into Q cols)
    # Three (TQ,C)x(C,C) matmuls instead of one (TQ,C)x(C,3C): only a (TQ,C) f32
    # temporary is live at a time and each output's cast/writeback starts earlier.
    x = x_ref[...]
    q_ref[...] = jnp.dot(x, w_ref[:, :dim],
                         preferred_element_type=jnp.float32).astype(q_ref.dtype)
    k_ref[...] = jnp.dot(x, w_ref[:, dim:2 * dim],
                         preferred_element_type=jnp.float32).astype(k_ref.dtype)
    v_ref[...] = jnp.dot(x, w_ref[:, 2 * dim:],
                         preferred_element_type=jnp.float32).astype(v_ref.dtype)


def _attn_kernel(q_ref, k_ref, v_ref, wp_ref, bp_ref, o_ref,
                 acc_sc, m_sc, l_sc,
                 *, num_heads, head_dim, n_real, padded):
    # q_ref: (TQ, C) bf16 (scale pre-folded); k_ref/v_ref: (TK, C) bf16
    # wp_ref: (C, C) bf16; bp_ref: (1, C) f32; o_ref: (TQ, C)
    # acc_sc: (TQ, C) f32 running output; m_sc/l_sc: (TQ, H) f32 running max/sum.
    kv = pl.program_id(2)
    nk = pl.num_programs(2)
    tq = q_ref.shape[0]
    tk = k_ref.shape[0]

    @pl.when(kv == 0)
    def _init():
        m_sc[...] = jnp.full(m_sc.shape, -jnp.inf, m_sc.dtype)
        l_sc[...] = jnp.zeros(l_sc.shape, l_sc.dtype)
        acc_sc[...] = jnp.zeros(acc_sc.shape, acc_sc.dtype)

    # Additive key-padding bias, built once per grid step and shared by all heads:
    # one (1, TK) broadcast add per head instead of H full (TQ, TK) selects.
    # Kept in f32 (-1e30 would overflow bf16).
    if padded:
        key_idx = kv * tk + jax.lax.broadcasted_iota(jnp.int32, (1, tk), 1)
        mask_bias = jnp.where(key_idx < n_real,
                              jnp.float32(0.0), jnp.float32(-1e30))
    else:
        mask_bias = None

    # Process heads in pairs so the accumulator load/store is 2*head_dim lanes
    # wide (128 for head_dim=64) instead of masked half-width stores.
    group = 2 if num_heads % 2 == 0 else 1
    for g in range(num_heads // group):
        g_lo = g * group * head_dim
        g_hi = g_lo + group * head_dim
        acc_old = acc_sc[:, g_lo:g_hi]                    # (TQ, group*hd) f32
        new_parts = []
        for j in range(group):
            h = g * group + j
            lo = h * head_dim
            hi = lo + head_dim
            q_h = q_ref[:, lo:hi]                         # (TQ, hd) bf16 (scaled)
            k_h = k_ref[:, lo:hi]                         # (TK, hd) bf16
            v_h = v_ref[:, lo:hi]                         # (TK, hd) bf16

            # NT matmul: contract over head_dim without materializing k_h.T.
            # (If a bundle dump ever shows Mosaic inserting a per-head vxpose,
            #  switch to a pre-transposed K from kernel 1 instead.)
            s = jax.lax.dot_general(
                q_h, k_h, dimension_numbers=(((1,), (1,)), ((), ())),
                preferred_element_type=jnp.float32)       # (TQ, TK) f32
            if mask_bias is not None:
                s = s + mask_bias

            # Online softmax update (flash-style).
            m_prev = m_sc[:, h:h + 1]                     # (TQ, 1)
            m_new = jnp.maximum(m_prev, jnp.max(s, axis=-1, keepdims=True))
            alpha = jnp.exp(m_prev - m_new)               # (TQ, 1)
            p = jnp.exp(s - m_new)                        # (TQ, TK) f32
            l_sc[:, h:h + 1] = alpha * l_sc[:, h:h + 1] + \
                jnp.sum(p, axis=-1, keepdims=True)
            m_sc[:, h:h + 1] = m_new

            o_h = jnp.dot(p.astype(v_ref.dtype), v_h,
                          preferred_element_type=jnp.float32)   # (TQ, hd) f32
            new_parts.append(
                alpha * acc_old[:, j * head_dim:(j + 1) * head_dim] + o_h)

        if group == 2:
            acc_sc[:, g_lo:g_hi] = jnp.concatenate(new_parts, axis=-1)
        else:
            acc_sc[:, g_lo:g_hi] = new_parts[0]

    @pl.when(kv == nk - 1)
    def _finalize():
        # Softmax normalization folded in once after the key loop: H EUP-approx
        # reciprocals instead of TQ*N divides on the VPU.
        inv_parts = []
        for h in range(num_heads):
            inv = pl.reciprocal(l_sc[:, h:h + 1], approx=True)   # (TQ, 1)
            inv_parts.append(jnp.broadcast_to(inv, (tq, head_dim)))
        inv_full = jnp.concatenate(inv_parts, axis=-1)            # (TQ, C)
        normed = acc_sc[...] * inv_full
        out = jnp.dot(normed.astype(wp_ref.dtype), wp_ref[...],
                      preferred_element_type=jnp.float32) + bp_ref[...]
        o_ref[...] = out.astype(o_ref.dtype)


def multi_head_self_attention(x, w_qkv, w_proj, b_proj, *, num_heads, q_tile=None):
    """x: (B, N, C); w_qkv: (3C, C) (no bias); w_proj: (C, C); b_proj: (C,)."""
    B, N, C = x.shape
    assert C % num_heads == 0, "dim must be divisible by num_heads"
    head_dim = C // num_heads
    scale = head_dim ** (-0.5)
    out_dtype = x.dtype
    kind = _device_kind()

    if q_tile is None:
        q_tile = _pick_q_tile(N, kind)
    n_pad = _round_up(N, q_tile)
    nq = n_pad // q_tile
    k_tile = q_tile          # key-tile axis: K/V VMEM is O(k_tile*C), not O(N*C)
    nk = n_pad // k_tile
    padded = (n_pad != N)

    # ---- wrapper glue: pad N, pre-transpose weights, fold scale into W_q, cast bf16.
    if padded:
        x = jnp.pad(x, ((0, 0), (0, n_pad - N), (0, 0)))
    w_qkv_t = jnp.transpose(w_qkv)                      # (C, 3C)
    w_qkv_t = w_qkv_t.at[:, :C].multiply(scale)         # fold 1/sqrt(hd) into W_q
    x_bf = x.astype(jnp.bfloat16)
    w_qkv_bf = w_qkv_t.astype(jnp.bfloat16)
    w_proj_bf = jnp.transpose(w_proj).astype(jnp.bfloat16)   # (C, C)
    b_proj_2d = b_proj.reshape(1, C).astype(jnp.float32)

    # ---- kernel 1: qkv projection (computed once; bf16 Q/K/V outputs) ----
    k1_bytes = (2 * q_tile * C * 2          # x tile (double-buffered, bf16)
                + 3 * C * C * 2             # w_qkv (single-buffered)
                + 3 * 2 * q_tile * C * 2    # q,k,v out tiles (double-buffered)
                + q_tile * C * 4)           # f32 matmul temporary
    q, k, v = pl.pallas_call(
        functools.partial(_qkv_kernel, dim=C),
        out_shape=(
            jax.ShapeDtypeStruct((B, n_pad, C), jnp.bfloat16),
            jax.ShapeDtypeStruct((B, n_pad, C), jnp.bfloat16),
            jax.ShapeDtypeStruct((B, n_pad, C), jnp.bfloat16),
        ),
        grid_spec=pltpu.PrefetchScalarGridSpec(
            num_scalar_prefetch=0,
            grid=(B, nq),
            in_specs=[
                pl.BlockSpec((pl.Squeezed(), q_tile, C), lambda b, t: (b, t, 0)),
                # Constant-index weight block: single buffer (no 2x VMEM).
                pl.BlockSpec((C, 3 * C), lambda b, t: (0, 0),
                             pipeline_mode=pl.Buffered(1)),
            ],
            out_specs=(
                pl.BlockSpec((pl.Squeezed(), q_tile, C), lambda b, t: (b, t, 0)),
                pl.BlockSpec((pl.Squeezed(), q_tile, C), lambda b, t: (b, t, 0)),
                pl.BlockSpec((pl.Squeezed(), q_tile, C), lambda b, t: (b, t, 0)),
            ),
        ),
        compiler_params=pltpu.CompilerParams(
            dimension_semantics=("parallel", "parallel"),
            vmem_limit_bytes=_vmem_limit_bytes(k1_bytes, kind)),
    )(x_bf, w_qkv_bf)

    # ---- kernel 2: flash-style attention + output projection, grid (B, nq, nk) ----
    k2_bytes = (2 * q_tile * C * 2                               # Q tile (db)
                + 2 * 2 * k_tile * C * 2                         # K, V tiles (db)
                + C * C * 2 + 4 * C                              # W_proj^T (sb) + bias
                + 2 * q_tile * C * jnp.dtype(out_dtype).itemsize  # out tile (db)
                + q_tile * C * 4                                 # acc scratch
                + 2 * q_tile * num_heads * 4                     # m/l scratch
                + 2 * q_tile * k_tile * 4)                       # score/p f32 temps
    out_padded = pl.pallas_call(
        functools.partial(_attn_kernel, num_heads=num_heads, head_dim=head_dim,
                          n_real=N, padded=padded),
        out_shape=jax.ShapeDtypeStruct((B, n_pad, C), out_dtype),
        grid_spec=pltpu.PrefetchScalarGridSpec(
            num_scalar_prefetch=0,
            grid=(B, nq, nk),
            in_specs=[
                pl.BlockSpec((pl.Squeezed(), q_tile, C),
                             lambda b, t, s: (b, t, 0)),          # Q tile
                pl.BlockSpec((pl.Squeezed(), k_tile, C),
                             lambda b, t, s: (b, s, 0)),          # K tile
                pl.BlockSpec((pl.Squeezed(), k_tile, C),
                             lambda b, t, s: (b, s, 0)),          # V tile
                pl.BlockSpec((C, C), lambda b, t, s: (0, 0),
                             pipeline_mode=pl.Buffered(1)),       # W_proj^T (const)
                pl.BlockSpec((1, C), lambda b, t, s: (0, 0),
                             pipeline_mode=pl.Buffered(1)),       # bias (const)
            ],
            out_specs=pl.BlockSpec((pl.Squeezed(), q_tile, C),
                                   lambda b, t, s: (b, t, 0)),
            scratch_shapes=[
                pltpu.VMEM((q_tile, C), jnp.float32),             # running output
                pltpu.VMEM((q_tile, num_heads), jnp.float32),     # running max
                pltpu.VMEM((q_tile, num_heads), jnp.float32),     # running sum
            ],
        ),
        compiler_params=pltpu.CompilerParams(
            dimension_semantics=("parallel", "parallel", "arbitrary"),
            vmem_limit_bytes=_vmem_limit_bytes(k2_bytes, kind)),
    )(q, k, v, w_proj_bf, b_proj_2d)

    if padded:
        out_padded = out_padded[:, :N, :]
    return out_padded


def _reference(x, w_qkv, w_proj, b_proj, num_heads):
    """Plain-JAX f32 mirror of the PyTorch forward."""
    B, N, C = x.shape
    hd = C // num_heads
    scale = hd ** (-0.5)
    qkv = x @ w_qkv.T
    qkv = qkv.reshape(B, N, 3, num_heads, hd).transpose(2, 0, 3, 1, 4)
    q, k, v = qkv[0], qkv[1], qkv[2]
    attn = jnp.einsum('bhnd,bhmd->bhnm', q, k) * scale
    attn = jax.nn.softmax(attn, axis=-1)
    out = jnp.einsum('bhnm,bhmd->bhnd', attn, v)
    out = out.transpose(0, 2, 1, 3).reshape(B, N, C)
    return out @ w_proj.T + b_proj


if __name__ == "__main__":
    num_heads = 8
    key = jax.random.PRNGKey(0)
    kx, kqkv, kp, kb, kx2, kx3 = jax.random.split(key, 6)

    C = 32
    w_qkv = jax.random.normal(kqkv, (3 * C, C), dtype=jnp.float32) * 0.05
    w_proj = jax.random.normal(kp, (C, C), dtype=jnp.float32) * 0.05
    b_proj = jax.random.normal(kb, (C,), dtype=jnp.float32) * 0.05

    # Check 1: (B, N, C) = (2, 16, 32); single query/key tile, no padding.
    B, N = 2, 16
    x = jax.random.normal(kx, (B, N, C), dtype=jnp.float32)
    out = multi_head_self_attention(x, w_qkv, w_proj, b_proj, num_heads=num_heads)
    out = jax.block_until_ready(out)
    ref = _reference(x, w_qkv, w_proj, b_proj, num_heads)
    assert out.shape == (B, N, C)
    # bf16 MXU inputs + approx reciprocal => compare against f32 ref with loose tol.
    assert jnp.allclose(out, ref, atol=2e-2, rtol=2e-2), "mismatch vs reference"

    # Check 2: non-aligned N exercises padding + key masking.
    B2, N2 = 1, 20
    x2 = jax.random.normal(kx2, (B2, N2, C), dtype=jnp.float32)
    out2 = multi_head_self_attention(x2, w_qkv, w_proj, b_proj, num_heads=num_heads)
    out2 = jax.block_until_ready(out2)
    ref2 = _reference(x2, w_qkv, w_proj, b_proj, num_heads)
    assert out2.shape == (B2, N2, C)
    assert jnp.allclose(out2, ref2, atol=2e-2, rtol=2e-2), "mismatch (padded N)"

    # Check 3: forced small q_tile so the key-tile (online-softmax) axis has
    # multiple steps, plus padding in the last key tile.
    B3, N3 = 1, 150
    x3 = jax.random.normal(kx3, (B3, N3, C), dtype=jnp.float32)
    out3 = multi_head_self_attention(x3, w_qkv, w_proj, b_proj,
                                     num_heads=num_heads, q_tile=64)
    out3 = jax.block_until_ready(out3)
    ref3 = _reference(x3, w_qkv, w_proj, b_proj, num_heads)
    assert out3.shape == (B3, N3, C)
    assert jnp.allclose(out3, ref3, atol=2e-2, rtol=2e-2), "mismatch (multi key tile)"

    print("KERNEL_OK")
</pallas_src>

<mosaic_0001>
module attributes {stable_mosaic.version = 11 : i64} {
  func.func @_qkv_kernel(%arg0: i32, %arg1: i32, %arg2: memref<1x16x32xbf16, #tpu.memory_space<vmem>>, %arg3: memref<32x96xbf16, #tpu.memory_space<vmem>>, %arg4: memref<1x16x32xbf16, #tpu.memory_space<vmem>>, %arg5: memref<1x16x32xbf16, #tpu.memory_space<vmem>>, %arg6: memref<1x16x32xbf16, #tpu.memory_space<vmem>>) attributes {dimension_semantics = [#tpu.dimension_semantics<parallel>, #tpu.dimension_semantics<parallel>], iteration_bounds = array<i64: 2, 1>, scalar_prefetch = 0 : i64, scratch_operands = 0 : i64, tpu.core_type = #tpu.core_type<tc>, window_params = [{transform_indices = @transform_0, window_bounds = array<i64: 1, 16, 32>}, {pipeline_mode = #tpu.pipeline_mode<synchronous>, transform_indices = @transform_1, window_bounds = array<i64: 32, 96>}, {transform_indices = @transform_2, window_bounds = array<i64: 1, 16, 32>}, {transform_indices = @transform_3, window_bounds = array<i64: 1, 16, 32>}, {transform_indices = @transform_4, window_bounds = array<i64: 1, 16, 32>}]} {
    %c0 = arith.constant 0 : index
    %c0_0 = arith.constant 0 : index
    %c0_1 = arith.constant 0 : index
    %0 = vector.load %arg2[%c0, %c0_0, %c0_1] : memref<1x16x32xbf16, #tpu.memory_space<vmem>>, vector<1x16x32xbf16>
    %1 = vector.shape_cast %0 : vector<1x16x32xbf16> to vector<16x32xbf16>
    %c0_2 = arith.constant 0 : index
    %c0_3 = arith.constant 0 : index
    %2 = vector.load %arg3[%c0_2, %c0_3] : memref<32x96xbf16, #tpu.memory_space<vmem>>, vector<32x32xbf16>
    %cst = arith.constant dense<0.000000e+00> : vector<16x32xf32>
    %3 = tpu.matmul %1, %2, %cst {dimension_numbers = #tpu.dot_dimension_numbers<[1], [0], [0], [1], [0, 0, 1, 1], [], []>} : vector<16x32xbf16>, vector<32x32xbf16>, vector<16x32xf32> -> vector<16x32xf32>
    %4 = arith.truncf %3 : vector<16x32xf32> to vector<16x32xbf16>
    %c0_4 = arith.constant 0 : index
    %c0_5 = arith.constant 0 : index
    %c0_6 = arith.constant 0 : index
    %5 = vector.load %arg4[%c0_4, %c0_5, %c0_6] : memref<1x16x32xbf16, #tpu.memory_space<vmem>>, vector<1x16x32xbf16>
    %6 = vector.shape_cast %5 : vector<1x16x32xbf16> to vector<16x32xbf16>
    %7 = vector.shape_cast %4 : vector<16x32xbf16> to vector<1x16x32xbf16>
    tpu.vector_store %arg4[%c0_4, %c0_5, %c0_6], %7 {strides = array<i32>} : memref<1x16x32xbf16, #tpu.memory_space<vmem>>, vector<1x16x32xbf16>,
    %c0_7 = arith.constant 0 : index
    %c32 = arith.constant 32 : index
    %8 = vector.load %arg3[%c0_7, %c32] : memref<32x96xbf16, #tpu.memory_space<vmem>>, vector<32x32xbf16>
    %cst_8 = arith.constant dense<0.000000e+00> : vector<16x32xf32>
    %9 = tpu.matmul %1, %8, %cst_8 {dimension_numbers = #tpu.dot_dimension_numbers<[1], [0], [0], [1], [0, 0, 1, 1], [], []>} : vector<16x32xbf16>, vector<32x32xbf16>, vector<16x32xf32> -> vector<16x32xf32>
    %10 = arith.truncf %9 : vector<16x32xf32> to vector<16x32xbf16>
    %c0_9 = arith.constant 0 : index
    %c0_10 = arith.constant 0 : index
    %c0_11 = arith.constant 0 : index
    %11 = vector.load %arg5[%c0_9, %c0_10, %c0_11] : memref<1x16x32xbf16, #tpu.memory_space<vmem>>, vector<1x16x32xbf16>
    %12 = vector.shape_cast %11 : vector<1x16x32xbf16> to vector<16x32xbf16>
    %13 = vector.shape_cast %10 : vector<16x32xbf16> to vector<1x16x32xbf16>
    tpu.vector_store %arg5[%c0_9, %c0_10, %c0_11], %13 {strides = array<i32>} : memref<1x16x32xbf16, #tpu.memory_space<vmem>>, vector<1x16x32xbf16>,
    %c0_12 = arith.constant 0 : index
    %c64 = arith.constant 64 : index
    %14 = vector.load %arg3[%c0_12, %c64] : memref<32x96xbf16, #tpu.memory_space<vmem>>, vector<32x32xbf16>
    %cst_13 = arith.constant dense<0.000000e+00> : vector<16x32xf32>
    %15 = tpu.matmul %1, %14, %cst_13 {dimension_numbers = #tpu.dot_dimension_numbers<[1], [0], [0], [1], [0, 0, 1, 1], [], []>} : vector<16x32xbf16>, vector<32x32xbf16>, vector<16x32xf32> -> vector<16x32xf32>
    %16 = arith.truncf %15 : vector<16x32xf32> to vector<16x32xbf16>
    %c0_14 = arith.constant 0 : index
    %c0_15 = arith.constant 0 : index
    %c0_16 = arith.constant 0 : index
    %17 = vector.load %arg6[%c0_14, %c0_15, %c0_16] : memref<1x16x32xbf16, #tpu.memory_space<vmem>>, vector<1x16x32xbf16>
    %18 = vector.shape_cast %17 : vector<1x16x32xbf16> to vector<16x32xbf16>
    %19 = vector.shape_cast %16 : vector<16x32xbf16> to vector<1x16x32xbf16>
    tpu.vector_store %arg6[%c0_14, %c0_15, %c0_16], %19 {strides = array<i32>} : memref<1x16x32xbf16, #tpu.memory_space<vmem>>, vector<1x16x32xbf16>,
    return
  }
  func.func @transform_0(%arg0: i32, %arg1: i32) -> (i32, i32, i32) {
    %c0_i32 = arith.constant 0 : i32
    %c0_i32_0 = arith.constant 0 : i32
    return %arg0, %arg1, %c0_i32 : i32, i32, i32
  }
  func.func @transform_1(%arg0: i32, %arg1: i32) -> (i32, i32) {
    %c0_i32 = arith.constant 0 : i32
    %c0_i32_0 = arith.constant 0 : i32
    %c0_i32_1 = arith.constant 0 : i32
    return %c0_i32, %c0_i32_0 : i32, i32
  }
  func.func @transform_2(%arg0: i32, %arg1: i32) -> (i32, i32, i32) {
    %c0_i32 = arith.constant 0 : i32
    %c0_i32_0 = arith.constant 0 : i32
    return %arg0, %arg1, %c0_i32 : i32, i32, i32
  }
  func.func @transform_3(%arg0: i32, %arg1: i32) -> (i32, i32, i32) {
    %c0_i32 = arith.constant 0 : i32
    %c0_i32_0 = arith.constant 0 : i32
    return %arg0, %arg1, %c0_i32 : i32, i32, i32
  }
  func.func @transform_4(%arg0: i32, %arg1: i32) -> (i32, i32, i32) {
    %c0_i32 = arith.constant 0 : i32
    %c0_i32_0 = arith.constant 0 : i32
    return %arg0, %arg1, %c0_i32 : i32, i32, i32
  }
}

</mosaic_0001>

<llo_original>
// kernel: tpu_custom_call.1
$region0: #{tpu_custom_call.1}
  #allocation0 [shape = 'u32[]', space=smem, size = 0x4, offset = 0x4, fixed_abs, tag = 'smem constant byte address 0x4 - core index']
  #allocation1 [shape = 'u32[144,128]{1,0:T(1,128)}', space=vmem, size = 0x12000, scoped, tag = 'internal scratch']
  %s0 = inlined_call_operand.hbm [shape: bf16[2,16,32], index: 0, kind: input, shape index: {}]
  %s1 = inlined_call_operand.hbm [shape: bf16[32,96], index: 1, kind: input, shape index: {}]
  %s2 = inlined_call_operand.hbm [shape: bf16[2,16,32], index: 2, kind: output, shape index: {0}]
  %s3 = inlined_call_operand.hbm [shape: bf16[2,16,32], index: 3, kind: output, shape index: {1}]
  %s4 = inlined_call_operand.hbm [shape: bf16[2,16,32], index: 4, kind: output, shape index: {2}]
  %5 = xla_tuple %s2, %s3, %s4
  %s6 = sld [smem:[#allocation0]]
  $region65: #{tpu_custom_call.1} parent=0
    _
  %s8 = ssub.s32 1, %s6
  %s9 = scalar_select 0, %s8, %s6
  $region1: #{tpu_custom_call.1} parent=0
    #allocation2 [shape = 'u8[8192]{0}', space=vmem, size = 0x2000, scoped, tag = 'input window, operand 0']
    #allocation3 [shape = 's32[2]{0}', space=sflag, size = 0x8, scoped, tag = 'scoped memory for tpu_custom_call.1']
    #allocation4 [shape = 's32[2]{0}', space=sflag, size = 0x8, scoped, tag = 'scoped memory for tpu_custom_call.1']
    #allocation5 [shape = 'u8[8192]{0}', space=vmem, size = 0x2000, scoped, tag = 'input window, operand 1, single buffered']
    #allocation6 [shape = 's32[1]{0}', space=sflag, size = 0x4, scoped, tag = 'scoped memory for tpu_custom_call.1']
    #allocation7 [shape = 'u8[8192]{0}', space=vmem, size = 0x2000, scoped, tag = 'output window, operand 0']
    #allocation8 [shape = 'u8[8192]{0}', space=vmem, size = 0x2000, scoped, tag = 'output window, operand 1']
    #allocation9 [shape = 's32[2]{0}', space=sflag, size = 0x8, scoped, tag = 'scoped memory for tpu_custom_call.1']
    #allocation10 [shape = 'u8[8192]{0}', space=vmem, size = 0x2000, scoped, tag = 'output window, operand 2']
    %10 = vsyncpa [#allocation3], 0
    %s11 = scalar_lea.sflag [#allocation3], 1
    %12 = vsyncpa %s11, 0
    %13 = vsyncpa [#allocation6], 0
    %14 = vsyncpa [#allocation4], 0
    %s15 = scalar_lea.sflag [#allocation4], 1
    %16 = vsyncpa %s15, 0
    %17 = vsyncpa [#allocation9], 0
    %s18 = scalar_lea.sflag [#allocation9], 1
    %19 = vsyncpa %s18, 0
    loop: start=0, step=1, limit=4
    $region2: #{tpu_custom_call.1} parent=1 // loop_pre_header
      _
    $region3: #{tpu_custom_call.1} parent=1 // loop_header
      %s21 = sphi 0, %s25
      %p22 = scmp.ge.s32.totalorder %s21, 4
      %s28 = sphi 0, %s40
      %s29 = sphi 0, %s36
      %s30 = sphi 0, %s28
      %s31 = sphi 0, %s29
      %s32 = sphi 0, %s30
      %s33 = sphi 0, %s31
      %s45 = sphi 0, %s47
      %s48 = sphi 0, %s45
      %s49 = sphi 0, %s48
      %s65 = sphi 0, %s49
      %s69 = sphi 0, %s69
      %s71 = sphi 0, %s69
      %s72 = sphi 0, %s71
      %s86 = sphi 0, %s72
      %s94 = sphi 0, %s96
      %s97 = sphi 0, %s94
      %s98 = sphi 0, %s97
      %s114 = sphi 0, %s98
      %s122 = sphi 0, %s124
      %s125 = sphi 0, %s122
      %s126 = sphi 0, %s125
      %s142 = sphi 0, %s126
      %s150 = sphi 0, %s152
      %s153 = sphi 0, %s150
      %s154 = sphi 0, %s153
      %s170 = sphi 0, %s154
    $region4: #{tpu_custom_call.1} parent=1 // loop_header_branch
      %24 = sbr.rel (%p22) target = $region8
    $region5: #{tpu_custom_call.1} parent=1 // loop_body
      %s26 = ssub.s32 %s21, 1
      %s27 = ssub.s32 %s21, 2
      %s34 = sadd.s32 1, %s29
      %p35 = scmp.ge.s32.totalorder %s34, 1
      %s36 = scalar_select %p35, 0, %s34
      %s37 = sadd.s32 1, %s28
      %s38 = scalar_select %p35, %s37, %s28
      %p39 = scmp.ge.s32.totalorder %s38, 2
      %s40 = scalar_select %p39, 0, %s38
      %s41 = ssub.s32 %s28, %s40
      %s42 = ssub.s32 %s29, %s36
      %s43 = sor.u32 %s41, %s42
      %p44 = scmp.eq.s32.totalorder %s43, 0
      %s46 = sadd.s32 %s45, 1
      %s47 = scalar_select %p44, %s45, %s46
      %p50 = pneg %p44
      %p51 = scmp.eq.s32.totalorder %s21, 1
      %p52 = por %p50, %p51
      %p53 = scmp.ne.s32.totalorder %s45, %s48
      %p54 = scmp.eq.s32.totalorder %s21, 0
      %p55 = por %p53, %p54
      %p56 = scmp.ne.s32.totalorder %s45, %s48
      %p57 = scmp.eq.s32.totalorder %s26, 1
      %p58 = por %p56, %p57
      %p59 = scmp.ne.s32.totalorder %s48, %s49
      %p60 = scmp.eq.s32.totalorder %s26, 0
      %p61 = por %p59, %p60
      %p62 = scmp.ne.s32.totalorder %s48, %s49
      %p63 = scmp.eq.s32.totalorder %s27, 1
      %p64 = por %p62, %p63
      %p66 = scmp.ne.s32.totalorder %s49, %s65
      %p67 = scmp.eq.s32.totalorder %s27, 0
      %p68 = por %p66, %p67
      %s70 = sadd.s32 %s69, 1
      %p73 = scmp.eq.s32.totalorder %s21, 1
      %p74 = scmp.ne.s32.totalorder %s69, %s71
      %p75 = scmp.eq.s32.totalorder %s21, 0
      %p76 = por %p74, %p75
      %p77 = scmp.ne.s32.totalorder %s69, %s71
      %p78 = scmp.eq.s32.totalorder %s26, 1
      %p79 = por %p77, %p78
      %p80 = scmp.ne.s32.totalorder %s71, %s72
      %p81 = scmp.eq.s32.totalorder %s26, 0
      %p82 = por %p80, %p81
      %p83 = scmp.ne.s32.totalorder %s71, %s72
      %p84 = scmp.eq.s32.totalorder %s27, 1
      %p85 = por %p83, %p84
      %p87 = scmp.ne.s32.totalorder %s72, %s86
      %p88 = scmp.eq.s32.totalorder %s27, 0
      %p89 = por %p87, %p88
      %s90 = ssub.s32 %s28, %s40
      %s91 = ssub.s32 %s29, %s36
      %s92 = sor.u32 %s90, %s91
      %p93 = scmp.eq.s32.totalorder %s92, 0
      %s95 = sadd.s32 %s94, 1
      %s96 = scalar_select %p93, %s94, %s95
      %p99 = pneg %p93
      %p100 = scmp.eq.s32.totalorder %s21, 1
      %p101 = por %p99, %p100
      %p102 = scmp.ne.s32.totalorder %s94, %s97
      %p103 = scmp.eq.s32.totalorder %s21, 0
      %p104 = por %p102, %p103
      %p105 = scmp.ne.s32.totalorder %s94, %s97
      %p106 = scmp.eq.s32.totalorder %s26, 1
      %p107 = por %p105, %p106
      %p108 = scmp.ne.s32.totalorder %s97, %s98
      %p109 = scmp.eq.s32.totalorder %s26, 0
      %p110 = por %p108, %p109
      %p111 = scmp.ne.s32.totalorder %s97, %s98
      %p112 = scmp.eq.s32.totalorder %s27, 1
      %p113 = por %p111, %p112
      %p115 = scmp.ne.s32.totalorder %s98, %s114
      %p116 = scmp.eq.s32.totalorder %s27, 0
      %p117 = por %p115, %p116
      %s118 = ssub.s32 %s28, %s40
      %s119 = ssub.s32 %s29, %s36
      %s120 = sor.u32 %s118, %s119
      %p121 = scmp.eq.s32.totalorder %s120, 0
      %s123 = sadd.s32 %s122, 1
      %s124 = scalar_select %p121, %s122, %s123
      %p127 = pneg %p121
      %p128 = scmp.eq.s32.totalorder %s21, 1
      %p129 = por %p127, %p128
      %p130 = scmp.ne.s32.totalorder %s122, %s125
      %p131 = scmp.eq.s32.totalorder %s21, 0
      %p132 = por %p130, %p131
      %p133 = scmp.ne.s32.totalorder %s122, %s125
      %p134 = scmp.eq.s32.totalorder %s26, 1
      %p135 = por %p133, %p134
      %p136 = scmp.ne.s32.totalorder %s125, %s126
      %p137 = scmp.eq.s32.totalorder %s26, 0
      %p138 = por %p136, %p137
      %p139 = scmp.ne.s32.totalorder %s125, %s126
      %p140 = scmp.eq.s32.totalorder %s27, 1
      %p141 = por %p139, %p140
      %p143 = scmp.ne.s32.totalorder %s126, %s142
      %p144 = scmp.eq.s32.totalorder %s27, 0
      %p145 = por %p143, %p144
      %s146 = ssub.s32 %s28, %s40
      %s147 = ssub.s32 %s29, %s36
      %s148 = sor.u32 %s146, %s147
      %p149 = scmp.eq.s32.totalorder %s148, 0
      %s151 = sadd.s32 %s150, 1
      %s152 = scalar_select %p149, %s150, %s151
      %p155 = pneg %p149
      %p156 = scmp.eq.s32.totalorder %s21, 1
      %p157 = por %p155, %p156
      %p158 = scmp.ne.s32.totalorder %s150, %s153
      %p159 = scmp.eq.s32.totalorder %s21, 0
      %p160 = por %p158, %p159
      %p161 = scmp.ne.s32.totalorder %s150, %s153
      %p162 = scmp.eq.s32.totalorder %s26, 1
      %p163 = por %p161, %p162
      %p164 = scmp.ne.s32.totalorder %s153, %s154
      %p165 = scmp.eq.s32.totalorder %s26, 0
      %p166 = por %p164, %p165
      %p167 = scmp.ne.s32.totalorder %s153, %s154
      %p168 = scmp.eq.s32.totalorder %s27, 1
      %p169 = por %p167, %p168
      %p171 = scmp.ne.s32.totalorder %s154, %s170
      %p172 = scmp.eq.s32.totalorder %s27, 0
      %p173 = por %p171, %p172
      %p174 = scmp.le.s32.totalorder 1, %s21
      %p175 = scmp.lt.s32.totalorder %s21, 3
      %p176 = pnand %p174, %p175
      %p177 = pneg %p176
      // Predicated region
      $region9: #{tpu_custom_call.1} parent=5 // pred_check
        _
      $region10: #{tpu_custom_call.1} parent=5 // pred_check_branch
        %179 = sbr.rel (%p176) target = $region12
      $region11: #{tpu_custom_call.1} parent=5 // pred_region
        %s180 = ssub.s32 %s21, 1
        // Predicated region
        $region13: #{tpu_custom_call.1} parent=11 // pred_check
          %p181 = pneg %p82
        $region14: #{tpu_custom_call.1} parent=11 // pred_check_branch
          %183 = sbr.rel (%p181) target = $region16
        $region15: #{tpu_custom_call.1} parent=11 // pred_region
          %s185 = ssub.s32 256, 256
          %186 = vsyncadd [#allocation6], %s185
          %s187 = sshll.u32 [#allocation5], 4
          %s188 = int_to_ptr.vmem [resolvable:$true] %s187
          %193 = dma.hbm_to_vmem [thread:$0]  %s1, 256, %s188, [#allocation6], 64, 64, 4
        $region16: #{tpu_custom_call.1} parent=11 // pred_fallthru
          _
      $region12: #{tpu_custom_call.1} parent=5 // pred_fallthru
        _
      %p194 = scmp.lt.s32.totalorder %s21, 2
      // Predicated region
      $region17: #{tpu_custom_call.1} parent=5 // pred_check
        %p195 = pneg %p194
      $region18: #{tpu_custom_call.1} parent=5 // pred_check_branch
        %197 = sbr.rel (%p195) target = $region20
      $region19: #{tpu_custom_call.1} parent=5 // pred_region
        // Predicated region
        $region21: #{tpu_custom_call.1} parent=19 // pred_check
          %p198 = pneg %p55
        $region22: #{tpu_custom_call.1} parent=19 // pred_check_branch
          %200 = sbr.rel (%p198) target = $region24
        $region23: #{tpu_custom_call.1} parent=19 // pred_region
          %s201 = sand.u32 %s45, 1
          %s202 = scalar_lea.sflag [#allocation3], %s201
          %s203 = sand.u32 %s45, 1
          %s204 = smul.addr %s203, 8
          %s205 = scalar_lea.vmem [#allocation2], %s204
          %s206 = smul.u32 2, %s29
          %s208 = ssub.s32 128, 128
          %209 = vsyncadd %s202, %s208
          %s210 = smul.addr %s28, 2
          %s211 = sadd.s32 %s206, %s210
          %s212 = smul.addr %s211, 64
          %s213 = scalar_lea.hbm %s0, %s212
          %s214 = sshll.u32 %s205, 4
          %s215 = int_to_ptr.vmem [resolvable:$true] %s214
          %220 = dma.hbm_to_vmem [thread:$0]  %s213, 128, %s215, %s202, 64, 64, 4
        $region24: #{tpu_custom_call.1} parent=19 // pred_fallthru
          _
      $region20: #{tpu_custom_call.1} parent=5 // pred_fallthru
        _
      %p221 = scmp.le.s32.totalorder 1, %s21
      %p222 = scmp.lt.s32.totalorder %s21, 3
      %p223 = pnand %p221, %p222
      %p224 = pneg %p223
      // Predicated region
      $region25: #{tpu_custom_call.1} parent=5 // pred_check
        _
      $region26: #{tpu_custom_call.1} parent=5 // pred_check_branch
        %226 = sbr.rel (%p223) target = $region28
      $region27: #{tpu_custom_call.1} parent=5 // pred_region
        %s227 = ssub.s32 %s21, 1
        %s228 = sand.u32 %s48, 1
        %s229 = scalar_lea.sflag [#allocation3], %s228
        %s230 = sand.u32 %s48, 1
        %s231 = smul.addr %s230, 8
        %s232 = scalar_lea.vmem [#allocation2], %s231
        // Predicated region
        $region29: #{tpu_custom_call.1} parent=27 // pred_check
          %p233 = pneg %p61
        $region30: #{tpu_custom_call.1} parent=27 // pred_check_branch
          %235 = sbr.rel (%p233) target = $region32
        $region31: #{tpu_custom_call.1} parent=27 // pred_region
          %236 = dma.done %s229, 128
        $region32: #{tpu_custom_call.1} parent=27 // pred_fallthru
          _
        // Predicated region
        $region33: #{tpu_custom_call.1} parent=27 // pred_check
          %p237 = pneg %p82
        $region34: #{tpu_custom_call.1} parent=27 // pred_check_branch
          %239 = sbr.rel (%p237) target = $region36
        $region35: #{tpu_custom_call.1} parent=27 // pred_region
          %240 = dma.done [#allocation6], 256
        $region36: #{tpu_custom_call.1} parent=27 // pred_fallthru
          _
        %s241 = sand.u32 %s48, 1
        %s242 = scalar_lea.sflag [#allocation3], %s241
        %s243 = sand.u32 %s48, 1
        %s244 = smul.addr %s243, 8
        %s245 = scalar_lea.vmem [#allocation2], %s244
        %p246 = pneg %p61
        %p247 = pneg %p58
        %p248 = pneg %p82
        %p249 = pneg %p79
        %p250 = pneg %p110
        %p251 = pneg %p107
        %s252 = sand.u32 %s97, 1
        %s253 = scalar_lea.sflag [#allocation4], %s252
        %s254 = sand.u32 %s97, 1
        %s255 = smul.addr %s254, 8
        %s256 = scalar_lea.vmem [#allocation7], %s255
        %p257 = pneg %p138
        %p258 = pneg %p135
        %s259 = sand.u32 %s26, 1
        %s260 = scalar_lea.sflag [#allocation9], %s259
        %s261 = sand.u32 %s125, 1
        %s262 = smul.addr %s261, 8
        %s263 = scalar_lea.vmem [#allocation8], %s262
        %p264 = pneg %p166
        %p265 = pneg %p163
        %s266 = sand.u32 %s26, 1
        %s267 = scalar_lea.sflag [#allocation9], %s266
        %s268 = sand.u32 %s153, 1
        %s269 = smul.addr %s268, 8
        %s270 = scalar_lea.vmem [#allocation10], %s269
        %s271 = smul.u32 2, %s31
        %s272 = smul.u32 2, %s31
        %s273 = smul.u32 2, %s31
        %s274 = smul.u32 2, %s31
        %v276 = vld [vmem:[%s232] sm:$0xf]
        %v277 = vld [vmem:[%s232 + $0x4] sm:$0xf]
        %v278 = vld [vmem:[#allocation5] sm:$0xf]
        %v279 = vld [vmem:[#allocation5 + $0x4] sm:$0xf]
        %v280 = vld [vmem:[#allocation5 + $0x8] sm:$0xf]
        %v281 = vld [vmem:[#allocation5 + $0xc] sm:$0xf]
        %v284 = vunpack.c.l.b16 %v276
        %v285 = vunpack.c.l.b16 %v277
        %v286 = vpack.c.b16 %v285, %v284
        %v291 = vunpack.c.l.b16 %v278
        %v292 = vunpack.c.l.b16 %v279
        %v293 = vunpack.c.l.b16 %v280
        %v294 = vunpack.c.l.b16 %v281
        %v295 = vpack.c.b16 %v292, %v291
        %v296 = vpack.c.b16 %v294, %v293
        %vm299 = vcmask 261120
        %v301 = vsel %vm299, %v286, 0
        %303 = vmatprep.subr.bf16.mxu0 0
        %304 = vmatpush1.bf16.msra.mxu0 %v295
        %305 = vmatprep.subr.bf16.mxu0 0
        %306 = vmatpush1.bf16.msra.mxu0 %v296
        %307 = vmatprep.subr.bf16.mxu0 0
        %308 = vmatpush1.bf16.msra.mxu0 0
        %309 = vmatprep.subr.bf16.mxu0 0
        %310 = vmatpush1.bf16.msra.mxu0 0
        %311 = vmatprep.subr.bf16.mxu0 0
        %312 = vmatpush1.bf16.msra.mxu0 0
        %313 = vmatprep.subr.bf16.mxu0 0
        %314 = vmatpush1.bf16.msra.mxu0 0
        %315 = vmatprep.subr.bf16.mxu0 0
        %316 = vmatpush1.bf16.msra.mxu0 0
        %317 = vmatprep.subr.bf16.mxu0 0
        %318 = vmatpush1.bf16.msra.mxu0 0
        %319 = vmatprep.subr.bf16.mxu0 0
        %320 = vmatpush1.bf16.msra.mxu0 0
        %321 = vmatprep.subr.bf16.mxu0 0
        %322 = vmatpush1.bf16.msra.mxu0 0
        %323 = vmatprep.subr.bf16.mxu0 0
        %324 = vmatpush1.bf16.msra.mxu0 0
        %325 = vmatprep.subr.bf16.mxu0 0
        %326 = vmatpush1.bf16.msra.mxu0 0
        %327 = vmatprep.subr.bf16.mxu0 0
        %328 = vmatpush1.bf16.msra.mxu0 0
        %329 = vmatprep.subr.bf16.mxu0 0
        %330 = vmatpush1.bf16.msra.mxu0 0
        %331 = vmatprep.subr.bf16.mxu0 0
        %332 = vmatpush1.bf16.msra.mxu0 0
        %333 = vmatprep.subr.bf16.mxu0 0
        %334 = vmatpush1.bf16.msra.mxu0 0
        %335 = vmatprep.mubr.bf16.mxu0 0
        %336 = vmatmul.mubr.bf16.gmra.mrb[0].mxu0 %v301
        %v337 = vpop.f32.mrb[0].mxu0
        %v338 = vadd.f32 0.0, %v337
        %v339 = vpop.f32.mrb[0].mxu0
        %v340 = vpop.f32.mrb[0].mxu0
        %v341 = vadd.f32 0.0, %v340
        %v342 = vpop.f32.mrb[0].mxu0
        %343 = vdwg.mxu0
        %v344 = vpack.c.bf16 %v341, %v338
        %v346 = vunpack.c.l.b16 %v344
        %v347 = vunpack.c.h.b16 %v344
        %v348 = vpack.c.b16 %v346, %v346
        %v349 = vpack.c.b16 %v347, %v347
        %vm352 = vcmask 257024
        %353 = vst.msk [vmem:[%s256] sm:$0xf] %vm352, %v348
        %354 = vst.msk [vmem:[%s256 + $0x4] sm:$0xf] %vm352, %v349
        %v355 = vld [vmem:[#allocation5] sm:$0xf]
        %v356 = vld [vmem:[#allocation5 + $0x4] sm:$0xf]
        %v357 = vld [vmem:[#allocation5 + $0x8] sm:$0xf]
        %v358 = vld [vmem:[#allocation5 + $0xc] sm:$0xf]
        %v363 = vunpack.c.l.b16 %v355
        %v364 = vunpack.c.l.b16 %v356
        %v365 = vunpack.c.l.b16 %v357
        %v366 = vunpack.c.l.b16 %v358
        %v367 = vpack.c.b16 %v364, %v363
        %v368 = vpack.c.b16 %v366, %v365
        %369 = vrot.lane.b32.xlu0 %v367, 96
        %v370 = vpop.permute.xlu0 %369
        %371 = vrot.lane.b32.xlu0 %v368, 96
        %v372 = vpop.permute.xlu0 %371
        %375 = vmatprep.subr.bf16.mxu0 0
        %376 = vmatpush1.bf16.msra.mxu0 %v370
        %377 = vmatprep.subr.bf16.mxu0 0
        %378 = vmatpush1.bf16.msra.mxu0 %v372
        %379 = vmatprep.subr.bf16.mxu0 0
        %380 = vmatpush1.bf16.msra.mxu0 0
        %381 = vmatprep.subr.bf16.mxu0 0
        %382 = vmatpush1.bf16.msra.mxu0 0
        %383 = vmatprep.subr.bf16.mxu0 0
        %384 = vmatpush1.bf16.msra.mxu0 0
        %385 = vmatprep.subr.bf16.mxu0 0
        %386 = vmatpush1.bf16.msra.mxu0 0
        %387 = vmatprep.subr.bf16.mxu0 0
        %388 = vmatpush1.bf16.msra.mxu0 0
        %389 = vmatprep.subr.bf16.mxu0 0
        %390 = vmatpush1.bf16.msra.mxu0 0
        %391 = vmatprep.subr.bf16.mxu0 0
        %392 = vmatpush1.bf16.msra.mxu0 0
        %393 = vmatprep.subr.bf16.mxu0 0
        %394 = vmatpush1.bf16.msra.mxu0 0
        %395 = vmatprep.subr.bf16.mxu0 0
        %396 = vmatpush1.bf16.msra.mxu0 0
        %397 = vmatprep.subr.bf16.mxu0 0
        %398 = vmatpush1.bf16.msra.mxu0 0
        %399 = vmatprep.subr.bf16.mxu0 0
        %400 = vmatpush1.bf16.msra.mxu0 0
        %401 = vmatprep.subr.bf16.mxu0 0
        %402 = vmatpush1.bf16.msra.mxu0 0
        %403 = vmatprep.subr.bf16.mxu0 0
        %404 = vmatpush1.bf16.msra.mxu0 0
        %405 = vmatprep.subr.bf16.mxu0 0
        %406 = vmatpush1.bf16.msra.mxu0 0
        %407 = vmatprep.mubr.bf16.mxu0 0
        %408 = vmatmul.mubr.bf16.gmra.mrb[0].mxu0 %v301
        %v409 = vpop.f32.mrb[0].mxu0
        %v410 = vadd.f32 0.0, %v409
        %v411 = vpop.f32.mrb[0].mxu0
        %v412 = vpop.f32.mrb[0].mxu0
        %v413 = vadd.f32 0.0, %v412
        %v414 = vpop.f32.mrb[0].mxu0
        %415 = vdwg.mxu0
        %v416 = vpack.c.bf16 %v413, %v410
        %v418 = vunpack.c.l.b16 %v416
        %v419 = vunpack.c.h.b16 %v416
        %v420 = vpack.c.b16 %v418, %v418
        %v421 = vpack.c.b16 %v419, %v419
        %424 = vst.msk [vmem:[%s263] sm:$0xf] %vm352, %v420
        %425 = vst.msk [vmem:[%s263 + $0x4] sm:$0xf] %vm352, %v421
        %v426 = vld [vmem:[#allocation5] sm:$0xf]
        %v427 = vld [vmem:[#allocation5 + $0x4] sm:$0xf]
        %v428 = vld [vmem:[#allocation5 + $0x8] sm:$0xf]
        %v429 = vld [vmem:[#allocation5 + $0xc] sm:$0xf]
        %v434 = vunpack.c.l.b16 %v426
        %v435 = vunpack.c.l.b16 %v427
        %v436 = vunpack.c.l.b16 %v428
        %v437 = vunpack.c.l.b16 %v429
        %v438 = vpack.c.b16 %v435, %v434
        %v439 = vpack.c.b16 %v437, %v436
        %440 = vrot.lane.b32.xlu0 %v438, 64
        %v441 = vpop.permute.xlu0 %440
        %442 = vrot.lane.b32.xlu0 %v439, 64
        %v443 = vpop.permute.xlu0 %442
        %446 = vmatprep.subr.bf16.mxu0 0
        %447 = vmatpush1.bf16.msra.mxu0 %v441
        %448 = vmatprep.subr.bf16.mxu0 0
        %449 = vmatpush1.bf16.msra.mxu0 %v443
        %450 = vmatprep.subr.bf16.mxu0 0
        %451 = vmatpush1.bf16.msra.mxu0 0
        %452 = vmatprep.subr.bf16.mxu0 0
        %453 = vmatpush1.bf16.msra.mxu0 0
        %454 = vmatprep.subr.bf16.mxu0 0
        %455 = vmatpush1.bf16.msra.mxu0 0
        %456 = vmatprep.subr.bf16.mxu0 0
        %457 = vmatpush1.bf16.msra.mxu0 0
        %458 = vmatprep.subr.bf16.mxu0 0
        %459 = vmatpush1.bf16.msra.mxu0 0
        %460 = vmatprep.subr.bf16.mxu0 0
        %461 = vmatpush1.bf16.msra.mxu0 0
        %462 = vmatprep.subr.bf16.mxu0 0
        %463 = vmatpush1.bf16.msra.mxu0 0
        %464 = vmatprep.subr.bf16.mxu0 0
        %465 = vmatpush1.bf16.msra.mxu0 0
        %466 = vmatprep.subr.bf16.mxu0 0
        %467 = vmatpush1.bf16.msra.mxu0 0
        %468 = vmatprep.subr.bf16.mxu0 0
        %469 = vmatpush1.bf16.msra.mxu0 0
        %470 = vmatprep.subr.bf16.mxu0 0
        %471 = vmatpush1.bf16.msra.mxu0 0
        %472 = vmatprep.subr.bf16.mxu0 0
        %473 = vmatpush1.bf16.msra.mxu0 0
        %474 = vmatprep.subr.bf16.mxu0 0
        %475 = vmatpush1.bf16.msra.mxu0 0
        %476 = vmatprep.subr.bf16.mxu0 0
        %477 = vmatpush1.bf16.msra.mxu0 0
        %478 = vmatprep.mubr.bf16.mxu0 0
        %479 = vmatmul.mubr.bf16.gmra.mrb[0].mxu0 %v301
        %v480 = vpop.f32.mrb[0].mxu0
        %v481 = vadd.f32 0.0, %v480
        %v482 = vpop.f32.mrb[0].mxu0
        %v483 = vpop.f32.mrb[0].mxu0
        %v484 = vadd.f32 0.0, %v483
        %v485 = vpop.f32.mrb[0].mxu0
        %486 = vdwg.mxu0
        %v487 = vpack.c.bf16 %v484, %v481
        %v489 = vunpack.c.l.b16 %v487
        %v490 = vunpack.c.h.b16 %v487
        %v491 = vpack.c.b16 %v489, %v489
        %v492 = vpack.c.b16 %v490, %v490
        %495 = vst.msk [vmem:[%s270] sm:$0xf] %vm352, %v491
        %496 = vst.msk [vmem:[%s270 + $0x4] sm:$0xf] %vm352, %v492
        %s497 = sand.u32 %s97, 1
        %s498 = scalar_lea.sflag [#allocation4], %s497
        %s499 = sand.u32 %s97, 1
        %s500 = smul.addr %s499, 8
        %s501 = scalar_lea.vmem [#allocation7], %s500
        %s502 = sand.u32 %s26, 1
        %s503 = scalar_lea.sflag [#allocation9], %s502
        %s504 = sand.u32 %s125, 1
        %s505 = smul.addr %s504, 8
        %s506 = scalar_lea.vmem [#allocation8], %s505
        %s507 = sand.u32 %s26, 1
        %s508 = scalar_lea.sflag [#allocation9], %s507
        %s509 = sand.u32 %s153, 1
        %s510 = smul.addr %s509, 8
        %s511 = scalar_lea.vmem [#allocation10], %s510
        // Predicated region
        $region37: #{tpu_custom_call.1} parent=27 // pred_check
          %p512 = pneg %p107
        $region38: #{tpu_custom_call.1} parent=27 // pred_check_branch
          %514 = sbr.rel (%p512) target = $region40
        $region39: #{tpu_custom_call.1} parent=27 // pred_region
          %s515 = smul.u32 2, %s31
          %s517 = ssub.s32 128, 128
          %518 = vsyncadd %s498, %s517
          %s519 = smul.addr %s30, 2
          %s520 = sadd.s32 %s515, %s519
          %s521 = smul.addr %s520, 64
          %s522 = scalar_lea.hbm %s2, %s521
          %s523 = sshll.u32 %s501, 4
          %s524 = int_to_ptr.vmem [resolvable:$true] %s523
          %529 = dma.vmem_to_hbm [thread:$0]  %s524, 128, %s522, %s498, 64, 64, 4
        $region40: #{tpu_custom_call.1} parent=27 // pred_fallthru
          _
        // Predicated region
        $region41: #{tpu_custom_call.1} parent=27 // pred_check
          %p530 = pneg %p135
        $region42: #{tpu_custom_call.1} parent=27 // pred_check_branch
          %532 = sbr.rel (%p530) target = $region44
        $region43: #{tpu_custom_call.1} parent=27 // pred_region
          %s533 = smul.u32 2, %s31
          %s535 = ssub.s32 128, 128
          %536 = vsyncadd %s503, %s535
          %s537 = smul.addr %s30, 2
          %s538 = sadd.s32 %s533, %s537
          %s539 = smul.addr %s538, 64
          %s540 = scalar_lea.hbm %s3, %s539
          %s541 = sshll.u32 %s506, 4
          %s542 = int_to_ptr.vmem [resolvable:$true] %s541
          %547 = dma.vmem_to_hbm [thread:$0]  %s542, 128, %s540, %s503, 64, 64, 4
        $region44: #{tpu_custom_call.1} parent=27 // pred_fallthru
          _
        // Predicated region
        $region45: #{tpu_custom_call.1} parent=27 // pred_check
          %p548 = pneg %p163
        $region46: #{tpu_custom_call.1} parent=27 // pred_check_branch
          %550 = sbr.rel (%p548) target = $region48
        $region47: #{tpu_custom_call.1} parent=27 // pred_region
          %s551 = smul.u32 2, %s31
          %s553 = ssub.s32 128, 128
          %554 = vsyncadd %s508, %s553
          %s555 = smul.addr %s30, 2
          %s556 = sadd.s32 %s551, %s555
          %s557 = smul.addr %s556, 64
          %s558 = scalar_lea.hbm %s4, %s557
          %s559 = sshll.u32 %s511, 4
          %s560 = int_to_ptr.vmem [resolvable:$true] %s559
          %565 = dma.vmem_to_hbm [thread:$0]  %s560, 128, %s558, %s508, 64, 64, 4
        $region48: #{tpu_custom_call.1} parent=27 // pred_fallthru
          _
      $region28: #{tpu_custom_call.1} parent=5 // pred_fallthru
        _
      %p566 = scmp.le.s32.totalorder 2, %s21
      // Predicated region
      $region49: #{tpu_custom_call.1} parent=5 // pred_check
        %p567 = pneg %p566
      $region50: #{tpu_custom_call.1} parent=5 // pred_check_branch
        %569 = sbr.rel (%p567) target = $region52
      $region51: #{tpu_custom_call.1} parent=5 // pred_region
        %s570 = ssub.s32 %s21, 2
        // Predicated region
        $region53: #{tpu_custom_call.1} parent=51 // pred_check
          %p571 = pneg %p113
        $region54: #{tpu_custom_call.1} parent=51 // pred_check_branch
          %573 = sbr.rel (%p571) target = $region56
        $region55: #{tpu_custom_call.1} parent=51 // pred_region
          %s574 = sand.u32 %s98, 1
          %s575 = scalar_lea.sflag [#allocation4], %s574
          %s576 = sand.u32 %s98, 1
          %s577 = smul.addr %s576, 8
          %s578 = scalar_lea.vmem [#allocation7], %s577
          %579 = dma.done %s575, 128
        $region56: #{tpu_custom_call.1} parent=51 // pred_fallthru
          _
        // Predicated region
        $region57: #{tpu_custom_call.1} parent=51 // pred_check
          %p580 = pneg %p141
        $region58: #{tpu_custom_call.1} parent=51 // pred_check_branch
          %582 = sbr.rel (%p580) target = $region60
        $region59: #{tpu_custom_call.1} parent=51 // pred_region
          %s583 = sand.u32 %s27, 1
          %s584 = scalar_lea.sflag [#allocation9], %s583
          %s585 = sand.u32 %s126, 1
          %s586 = smul.addr %s585, 8
          %s587 = scalar_lea.vmem [#allocation8], %s586
          %588 = dma.done %s584, 128
        $region60: #{tpu_custom_call.1} parent=51 // pred_fallthru
          _
        // Predicated region
        $region61: #{tpu_custom_call.1} parent=51 // pred_check
          %p589 = pneg %p169
        $region62: #{tpu_custom_call.1} parent=51 // pred_check_branch
          %591 = sbr.rel (%p589) target = $region64
        $region63: #{tpu_custom_call.1} parent=51 // pred_region
          %s592 = sand.u32 %s27, 1
          %s593 = scalar_lea.sflag [#allocation9], %s592
          %s594 = sand.u32 %s154, 1
          %s595 = smul.addr %s594, 8
          %s596 = scalar_lea.vmem [#allocation10], %s595
          %597 = dma.done %s593, 128
        $region64: #{tpu_custom_call.1} parent=51 // pred_fallthru
          _
      $region52: #{tpu_custom_call.1} parent=5 // pred_fallthru
        _
    $region6: #{tpu_custom_call.1} parent=1 // loop_footer
      %s25 = sadd.s32 1, %s21
    $region7: #{tpu_custom_call.1} parent=1 // loop_footer_branch
      %20 = sbr.rel target = $region3
    $region8: #{tpu_custom_call.1} parent=1 // loop_exit
      _
    %598 = vsyncpa [#allocation3], 1
    %s599 = scalar_lea.sflag [#allocation3], 1
    %600 = vsyncpa %s599, 1
    %601 = vsyncpa [#allocation6], 1
    %602 = vsyncpa [#allocation4], 1
    %s603 = scalar_lea.sflag [#allocation4], 1
    %604 = vsyncpa %s603, 1
    %605 = vsyncpa [#allocation9], 1
    %s606 = scalar_lea.sflag [#allocation9], 1
    %607 = vsyncpa %s606, 1

</llo_original>
